<compile_context>
chip_gen: v7x
topology: tpu7x:2x2x1
jax: 0.10.0
libtpu: 0.0.40
codegen_flags: <defaults>
</compile_context>

<pallas_src>
import jax
import jax.numpy as jnp
from jax.experimental import pallas as pl
from jax.experimental.pallas import tpu as pltpu

_LANES = 128
_MAX_BLK_ROWS = 1024          # 1024*128 f32 = 512 KiB per input buffer
_PAD_LOGIT = -1.0e4           # exp(-1e4) == 0 in f32 -> CE/Dice contribution is 0


def _bce_dice_kernel(logits_ref, targets_ref,
                     ce_ref, inter_ref, psum_ref, tsum_ref):
    x = logits_ref[...].astype(jnp.float32)      # (blk_rows, 128)
    t = targets_ref[...].astype(jnp.float32)     # (blk_rows, 128)

    # Shared transcendental: e = exp(-|x|) feeds both the BCE log-term and
    # the sigmoid (one exp + one log + one reciprocal per element).
    ax = jnp.abs(x)
    e = jnp.exp(-ax)
    log_term = jnp.log(1.0 + e)                  # = log(1 + exp(-|x|))
    sig_abs = 1.0 / (1.0 + e)                    # sigmoid(|x|)
    p = jnp.where(x >= 0, sig_abs, 1.0 - sig_abs)  # sigmoid(x)

    # Numerically-stable BCEWithLogits element loss.
    ce_elem = jnp.maximum(x, 0.0) - x * t + log_term

    rows = x.shape[0]

    def fold(v):
        # (rows, 128) -> (8, 128) vector partial: tile-aligned reshape + VPU
        # adds only; the final cross-lane reduction happens in the wrapper.
        return jnp.sum(v.reshape(rows // 8, 8, _LANES), axis=0)

    ce_ref[...] = fold(ce_elem)
    inter_ref[...] = fold(p * t)
    psum_ref[...] = fold(p)
    tsum_ref[...] = fold(t)


def binary_ce_dice_loss(logits, targets, alpha=0.5, epsilon=1.0):
    """Returns (combined, cross_entropy, sorensen_dice) as f32 scalars."""
    assert logits.shape == targets.shape
    N = int(logits.shape[0])
    S = 1
    for d in logits.shape[1:]:
        S *= int(d)
    S = max(S, 1)

    # Layout: (N, rows_pad, 128); rows_pad is a multiple of blk_rows (mult. of 8).
    rows = -(-S // _LANES)
    if rows <= _MAX_BLK_ROWS:
        blk_rows = ((rows + 7) // 8) * 8
    else:
        blk_rows = _MAX_BLK_ROWS
    rows_pad = -(-rows // blk_rows) * blk_rows
    num_tiles = rows_pad // blk_rows
    s_pad = rows_pad * _LANES

    flat_l = logits.reshape(N, S)                 # keep native dtype (no upcast)
    flat_t = targets.reshape(N, S)
    if s_pad != S:
        pad = s_pad - S
        flat_l = jnp.pad(flat_l, ((0, 0), (0, pad)), constant_values=_PAD_LOGIT)
        flat_t = jnp.pad(flat_t, ((0, 0), (0, pad)), constant_values=0)
    l3 = flat_l.reshape(N, rows_pad, _LANES)
    t3 = flat_t.reshape(N, rows_pad, _LANES)

    part_shape = jax.ShapeDtypeStruct((N, num_tiles, 8, _LANES), jnp.float32)
    part_spec = pl.BlockSpec((None, None, 8, _LANES), lambda n, t: (n, t, 0, 0))
    in_spec = pl.BlockSpec((None, blk_rows, _LANES), lambda n, t: (n, t, 0))

    bytes_in = (l3.size * l3.dtype.itemsize + t3.size * t3.dtype.itemsize)
    bytes_out = 4 * N * num_tiles * 8 * _LANES * 4
    cost = pl.CostEstimate(flops=12 * N * s_pad,
                           transcendentals=3 * N * s_pad,
                           bytes_accessed=bytes_in + bytes_out)

    ce_p, inter_p, psum_p, tsum_p = pl.pallas_call(
        _bce_dice_kernel,
        out_shape=(part_shape, part_shape, part_shape, part_shape),
        grid_spec=pltpu.PrefetchScalarGridSpec(
            num_scalar_prefetch=0,
            grid=(N, num_tiles),
            in_specs=[in_spec, in_spec],
            out_specs=[part_spec, part_spec, part_spec, part_spec]),
        compiler_params=pltpu.CompilerParams(
            dimension_semantics=("parallel", "parallel"),
            vmem_limit_bytes=32 * 1024 * 1024),
        cost_estimate=cost,
    )(l3, t3)

    # Tiny final reduction / combine in plain JAX (keeps the grid fully parallel).
    ce = jnp.sum(ce_p) / jnp.float32(N * S)
    inter_n = jnp.sum(inter_p, axis=(1, 2, 3))
    p_n = jnp.sum(psum_p, axis=(1, 2, 3))
    t_n = jnp.sum(tsum_p, axis=(1, 2, 3))
    dice_coeff = (2.0 * inter_n + jnp.float32(epsilon)) / (p_n + t_n + jnp.float32(epsilon))
    dice = jnp.float32(1.0) - jnp.mean(dice_coeff)
    combined = jnp.float32(alpha) * ce + jnp.float32(1.0 - alpha) * dice
    return combined, ce, dice


def _reference(logits, targets, alpha=0.5, epsilon=1.0):
    """Pure-JAX reference mirroring the PyTorch module semantics."""
    N = logits.shape[0]
    x = logits.reshape(N, -1).astype(jnp.float32)
    t = targets.reshape(N, -1).astype(jnp.float32)
    ce = jnp.mean(jnp.maximum(x, 0.0) - x * t + jnp.log1p(jnp.exp(-jnp.abs(x))))
    p = jax.nn.sigmoid(x)
    inter = jnp.sum(p * t, axis=1)
    dice = 1.0 - jnp.mean((2.0 * inter + epsilon) /
                          (jnp.sum(p, axis=1) + jnp.sum(t, axis=1) + epsilon))
    return alpha * ce + (1.0 - alpha) * dice, ce, dice


if __name__ == "__main__":
    key = jax.random.PRNGKey(0)
    k1, k2 = jax.random.split(key)

    N, C, H, W = 2, 4, 16, 16
    logits = jax.random.normal(k1, (N, C, H, W), dtype=jnp.float32)
    targets = jax.random.uniform(k2, (N, C, H, W), dtype=jnp.float32)  # probabilities

    combined, ce, dice = binary_ce_dice_loss(logits, targets, alpha=0.5, epsilon=1.0)
    jax.block_until_ready((combined, ce, dice))

    rc, rce, rdice = _reference(logits, targets, alpha=0.5, epsilon=1.0)
    assert jnp.allclose(ce, rce, atol=1e-5), (ce, rce)
    assert jnp.allclose(dice, rdice, atol=1e-5), (dice, rdice)
    assert jnp.allclose(combined, rc, atol=1e-5), (combined, rc)

    print("KERNEL_OK")
</pallas_src>

<mosaic_0001>
module attributes {stable_mosaic.version = 11 : i64} {
  func.func @_bce_dice_kernel(%arg0: i32, %arg1: i32, %arg2: memref<1x8x128xf32, #tpu.memory_space<vmem>>, %arg3: memref<1x8x128xf32, #tpu.memory_space<vmem>>, %arg4: memref<1x1x8x128xf32, #tpu.memory_space<vmem>>, %arg5: memref<1x1x8x128xf32, #tpu.memory_space<vmem>>, %arg6: memref<1x1x8x128xf32, #tpu.memory_space<vmem>>, %arg7: memref<1x1x8x128xf32, #tpu.memory_space<vmem>>) attributes {dimension_semantics = [#tpu.dimension_semantics<parallel>, #tpu.dimension_semantics<parallel>], iteration_bounds = array<i64: 2, 1>, scalar_prefetch = 0 : i64, scratch_operands = 0 : i64, tpu.core_type = #tpu.core_type<tc>, window_params = [{transform_indices = @transform_0, window_bounds = array<i64: 1, 8, 128>}, {transform_indices = @transform_1, window_bounds = array<i64: 1, 8, 128>}, {transform_indices = @transform_2, window_bounds = array<i64: 1, 1, 8, 128>}, {transform_indices = @transform_3, window_bounds = array<i64: 1, 1, 8, 128>}, {transform_indices = @transform_4, window_bounds = array<i64: 1, 1, 8, 128>}, {transform_indices = @transform_5, window_bounds = array<i64: 1, 1, 8, 128>}]} {
    %c0 = arith.constant 0 : index
    %c0_0 = arith.constant 0 : index
    %c0_1 = arith.constant 0 : index
    %0 = vector.load %arg2[%c0, %c0_0, %c0_1] : memref<1x8x128xf32, #tpu.memory_space<vmem>>, vector<1x8x128xf32>
    %1 = vector.shape_cast %0 : vector<1x8x128xf32> to vector<8x128xf32>
    %c0_2 = arith.constant 0 : index
    %c0_3 = arith.constant 0 : index
    %c0_4 = arith.constant 0 : index
    %2 = vector.load %arg3[%c0_2, %c0_3, %c0_4] : memref<1x8x128xf32, #tpu.memory_space<vmem>>, vector<1x8x128xf32>
    %3 = vector.shape_cast %2 : vector<1x8x128xf32> to vector<8x128xf32>
    %4 = math.absf %1 : vector<8x128xf32>
    %cst = arith.constant 0.000000e+00 : f32
    %5 = vector.broadcast %cst : f32 to vector<8x128xf32>
    %6 = arith.subf %5, %4 : vector<8x128xf32>
    %7 = math.exp %6 : vector<8x128xf32>
    %cst_5 = arith.constant 1.000000e+00 : f32
    %8 = vector.broadcast %cst_5 : f32 to vector<8x128xf32>
    %9 = arith.addf %8, %7 : vector<8x128xf32>
    %10 = math.log %9 : vector<8x128xf32>
    %cst_6 = arith.constant 1.000000e+00 : f32
    %11 = vector.broadcast %cst_6 : f32 to vector<8x128xf32>
    %12 = arith.addf %11, %7 : vector<8x128xf32>
    %cst_7 = arith.constant 1.000000e+00 : f32
    %13 = vector.broadcast %cst_7 : f32 to vector<8x128xf32>
    %14 = arith.divf %13, %12 : vector<8x128xf32>
    %cst_8 = arith.constant 0.000000e+00 : f32
    %15 = vector.broadcast %cst_8 : f32 to vector<8x128xf32>
    %16 = arith.cmpf oge, %1, %15 : vector<8x128xf32>
    %cst_9 = arith.constant 1.000000e+00 : f32
    %17 = vector.broadcast %cst_9 : f32 to vector<8x128xf32>
    %18 = arith.subf %17, %14 : vector<8x128xf32>
    %19 = arith.select %16, %14, %18 : vector<8x128xi1>, vector<8x128xf32>
    %cst_10 = arith.constant 0.000000e+00 : f32
    %20 = vector.broadcast %cst_10 : f32 to vector<8x128xf32>
    %21 = arith.maximumf %1, %20 : vector<8x128xf32>
    %22 = arith.mulf %1, %3 : vector<8x128xf32>
    %23 = arith.subf %21, %22 : vector<8x128xf32>
    %24 = arith.addf %23, %10 : vector<8x128xf32>
    %25 = vector.shape_cast %24 : vector<8x128xf32> to vector<1x8x128xf32>
    %cst_11 = arith.constant dense<0.000000e+00> : vector<8x128xf32>
    %26 = vector.multi_reduction <add>, %25, %cst_11 [0] : vector<1x8x128xf32> to vector<8x128xf32>
    %c0_12 = arith.constant 0 : index
    %c0_13 = arith.constant 0 : index
    %c0_14 = arith.constant 0 : index
    %c0_15 = arith.constant 0 : index
    %27 = vector.load %arg4[%c0_12, %c0_13, %c0_14, %c0_15] : memref<1x1x8x128xf32, #tpu.memory_space<vmem>>, vector<1x1x8x128xf32>
    %28 = vector.shape_cast %27 : vector<1x1x8x128xf32> to vector<8x128xf32>
    %29 = vector.shape_cast %26 : vector<8x128xf32> to vector<1x1x8x128xf32>
    tpu.vector_store %arg4[%c0_12, %c0_13, %c0_14, %c0_15], %29 {strides = array<i32>} : memref<1x1x8x128xf32, #tpu.memory_space<vmem>>, vector<1x1x8x128xf32>,
    %30 = arith.mulf %19, %3 : vector<8x128xf32>
    %31 = vector.shape_cast %30 : vector<8x128xf32> to vector<1x8x128xf32>
    %cst_16 = arith.constant dense<0.000000e+00> : vector<8x128xf32>
    %32 = vector.multi_reduction <add>, %31, %cst_16 [0] : vector<1x8x128xf32> to vector<8x128xf32>
    %c0_17 = arith.constant 0 : index
    %c0_18 = arith.constant 0 : index
    %c0_19 = arith.constant 0 : index
    %c0_20 = arith.constant 0 : index
    %33 = vector.load %arg5[%c0_17, %c0_18, %c0_19, %c0_20] : memref<1x1x8x128xf32, #tpu.memory_space<vmem>>, vector<1x1x8x128xf32>
    %34 = vector.shape_cast %33 : vector<1x1x8x128xf32> to vector<8x128xf32>
    %35 = vector.shape_cast %32 : vector<8x128xf32> to vector<1x1x8x128xf32>
    tpu.vector_store %arg5[%c0_17, %c0_18, %c0_19, %c0_20], %35 {strides = array<i32>} : memref<1x1x8x128xf32, #tpu.memory_space<vmem>>, vector<1x1x8x128xf32>,
    %36 = vector.shape_cast %19 : vector<8x128xf32> to vector<1x8x128xf32>
    %cst_21 = arith.constant dense<0.000000e+00> : vector<8x128xf32>
    %37 = vector.multi_reduction <add>, %36, %cst_21 [0] : vector<1x8x128xf32> to vector<8x128xf32>
    %c0_22 = arith.constant 0 : index
    %c0_23 = arith.constant 0 : index
    %c0_24 = arith.constant 0 : index
    %c0_25 = arith.constant 0 : index
    %38 = vector.load %arg6[%c0_22, %c0_23, %c0_24, %c0_25] : memref<1x1x8x128xf32, #tpu.memory_space<vmem>>, vector<1x1x8x128xf32>
    %39 = vector.shape_cast %38 : vector<1x1x8x128xf32> to vector<8x128xf32>
    %40 = vector.shape_cast %37 : vector<8x128xf32> to vector<1x1x8x128xf32>
    tpu.vector_store %arg6[%c0_22, %c0_23, %c0_24, %c0_25], %40 {strides = array<i32>} : memref<1x1x8x128xf32, #tpu.memory_space<vmem>>, vector<1x1x8x128xf32>,
    %41 = vector.shape_cast %3 : vector<8x128xf32> to vector<1x8x128xf32>
    %cst_26 = arith.constant dense<0.000000e+00> : vector<8x128xf32>
    %42 = vector.multi_reduction <add>, %41, %cst_26 [0] : vector<1x8x128xf32> to vector<8x128xf32>
    %c0_27 = arith.constant 0 : index
    %c0_28 = arith.constant 0 : index
    %c0_29 = arith.constant 0 : index
    %c0_30 = arith.constant 0 : index
    %43 = vector.load %arg7[%c0_27, %c0_28, %c0_29, %c0_30] : memref<1x1x8x128xf32, #tpu.memory_space<vmem>>, vector<1x1x8x128xf32>
    %44 = vector.shape_cast %43 : vector<1x1x8x128xf32> to vector<8x128xf32>
    %45 = vector.shape_cast %42 : vector<8x128xf32> to vector<1x1x8x128xf32>
    tpu.vector_store %arg7[%c0_27, %c0_28, %c0_29, %c0_30], %45 {strides = array<i32>} : memref<1x1x8x128xf32, #tpu.memory_space<vmem>>, vector<1x1x8x128xf32>,
    return
  }
  func.func @transform_0(%arg0: i32, %arg1: i32) -> (i32, i32, i32) {
    %c0_i32 = arith.constant 0 : i32
    %c0_i32_0 = arith.constant 0 : i32
    return %arg0, %arg1, %c0_i32 : i32, i32, i32
  }
  func.func @transform_1(%arg0: i32, %arg1: i32) -> (i32, i32, i32) {
    %c0_i32 = arith.constant 0 : i32
    %c0_i32_0 = arith.constant 0 : i32
    return %arg0, %arg1, %c0_i32 : i32, i32, i32
  }
  func.func @transform_2(%arg0: i32, %arg1: i32) -> (i32, i32, i32, i32) {
    %c0_i32 = arith.constant 0 : i32
    %c0_i32_0 = arith.constant 0 : i32
    %c0_i32_1 = arith.constant 0 : i32
    return %arg0, %arg1, %c0_i32, %c0_i32_0 : i32, i32, i32, i32
  }
  func.func @transform_3(%arg0: i32, %arg1: i32) -> (i32, i32, i32, i32) {
    %c0_i32 = arith.constant 0 : i32
    %c0_i32_0 = arith.constant 0 : i32
    %c0_i32_1 = arith.constant 0 : i32
    return %arg0, %arg1, %c0_i32, %c0_i32_0 : i32, i32, i32, i32
  }
  func.func @transform_4(%arg0: i32, %arg1: i32) -> (i32, i32, i32, i32) {
    %c0_i32 = arith.constant 0 : i32
    %c0_i32_0 = arith.constant 0 : i32
    %c0_i32_1 = arith.constant 0 : i32
    return %arg0, %arg1, %c0_i32, %c0_i32_0 : i32, i32, i32, i32
  }
  func.func @transform_5(%arg0: i32, %arg1: i32) -> (i32, i32, i32, i32) {
    %c0_i32 = arith.constant 0 : i32
    %c0_i32_0 = arith.constant 0 : i32
    %c0_i32_1 = arith.constant 0 : i32
    return %arg0, %arg1, %c0_i32, %c0_i32_0 : i32, i32, i32, i32
  }
}

</mosaic_0001>

<llo_original>
// kernel: tpu_custom_call.1
$region0: #{tpu_custom_call.1}
  #allocation0 [shape = 'u32[]', space=smem, size = 0x4, offset = 0x4, fixed_abs, tag = 'smem constant byte address 0x4 - core index']
  #allocation1 [shape = 'u32[144,128]{1,0:T(1,128)}', space=vmem, size = 0x12000, scoped, tag = 'internal scratch']
  %s0 = inlined_call_operand.hbm [shape: f32[2,8,128], index: 0, kind: input, shape index: {}]
  %s1 = inlined_call_operand.hbm [shape: f32[2,8,128], index: 1, kind: input, shape index: {}]
  %s2 = inlined_call_operand.hbm [shape: f32[2,1,8,128], index: 2, kind: output, shape index: {0}]
  %s3 = inlined_call_operand.hbm [shape: f32[2,1,8,128], index: 3, kind: output, shape index: {1}]
  %s4 = inlined_call_operand.hbm [shape: f32[2,1,8,128], index: 4, kind: output, shape index: {2}]
  %s5 = inlined_call_operand.hbm [shape: f32[2,1,8,128], index: 5, kind: output, shape index: {3}]
  %6 = xla_tuple %s2, %s3, %s4, %s5
  %s7 = sld [smem:[#allocation0]]
  $region73: #{tpu_custom_call.1} parent=0
    _
  %s9 = ssub.s32 1, %s7
  %s10 = scalar_select 0, %s9, %s7
  $region1: #{tpu_custom_call.1} parent=0
    #allocation2 [shape = 'u8[8192]{0}', space=vmem, size = 0x2000, scoped, tag = 'input window, operand 0']
    #allocation3 [shape = 's32[2]{0}', space=sflag, size = 0x8, scoped, tag = 'scoped memory for tpu_custom_call.1']
    #allocation4 [shape = 's32[2]{0}', space=sflag, size = 0x8, scoped, tag = 'scoped memory for tpu_custom_call.1']
    #allocation5 [shape = 'u8[8192]{0}', space=vmem, size = 0x2000, scoped, tag = 'input window, operand 1']
    #allocation6 [shape = 's32[2]{0}', space=sflag, size = 0x8, scoped, tag = 'scoped memory for tpu_custom_call.1']
    #allocation7 [shape = 'u8[8192]{0}', space=vmem, size = 0x2000, scoped, tag = 'output window, operand 0']
    #allocation8 [shape = 'u8[8192]{0}', space=vmem, size = 0x2000, scoped, tag = 'output window, operand 1']
    #allocation9 [shape = 's32[2]{0}', space=sflag, size = 0x8, scoped, tag = 'scoped memory for tpu_custom_call.1']
    #allocation10 [shape = 'u8[8192]{0}', space=vmem, size = 0x2000, scoped, tag = 'output window, operand 2']
    #allocation11 [shape = 'u8[8192]{0}', space=vmem, size = 0x2000, scoped, tag = 'output window, operand 3']
    #allocation12 [shape = 's32[2]{0}', space=sflag, size = 0x8, scoped, tag = 'scoped memory for tpu_custom_call.1']
    %11 = vsyncpa [#allocation3], 0
    %s12 = scalar_lea.sflag [#allocation3], 1
    %13 = vsyncpa %s12, 0
    %14 = vsyncpa [#allocation6], 0
    %s15 = scalar_lea.sflag [#allocation6], 1
    %16 = vsyncpa %s15, 0
    %17 = vsyncpa [#allocation4], 0
    %s18 = scalar_lea.sflag [#allocation4], 1
    %19 = vsyncpa %s18, 0
    %20 = vsyncpa [#allocation9], 0
    %s21 = scalar_lea.sflag [#allocation9], 1
    %22 = vsyncpa %s21, 0
    %23 = vsyncpa [#allocation12], 0
    %s24 = scalar_lea.sflag [#allocation12], 1
    %25 = vsyncpa %s24, 0
    loop: start=0, step=1, limit=4
    $region2: #{tpu_custom_call.1} parent=1 // loop_pre_header
      _
    $region3: #{tpu_custom_call.1} parent=1 // loop_header
      %s27 = sphi 0, %s31
      %p28 = scmp.ge.s32.totalorder %s27, 4
      %s34 = sphi 0, %s46
      %s35 = sphi 0, %s42
      %s36 = sphi 0, %s34
      %s37 = sphi 0, %s35
      %s38 = sphi 0, %s36
      %s39 = sphi 0, %s37
      %s51 = sphi 0, %s53
      %s54 = sphi 0, %s51
      %s55 = sphi 0, %s54
      %s71 = sphi 0, %s55
      %s79 = sphi 0, %s81
      %s82 = sphi 0, %s79
      %s83 = sphi 0, %s82
      %s99 = sphi 0, %s83
      %s107 = sphi 0, %s109
      %s110 = sphi 0, %s107
      %s111 = sphi 0, %s110
      %s127 = sphi 0, %s111
      %s135 = sphi 0, %s137
      %s138 = sphi 0, %s135
      %s139 = sphi 0, %s138
      %s155 = sphi 0, %s139
      %s163 = sphi 0, %s165
      %s166 = sphi 0, %s163
      %s167 = sphi 0, %s166
      %s183 = sphi 0, %s167
      %s191 = sphi 0, %s193
      %s194 = sphi 0, %s191
      %s195 = sphi 0, %s194
      %s211 = sphi 0, %s195
    $region4: #{tpu_custom_call.1} parent=1 // loop_header_branch
      %30 = sbr.rel (%p28) target = $region8
    $region5: #{tpu_custom_call.1} parent=1 // loop_body
      %s32 = ssub.s32 %s27, 1
      %s33 = ssub.s32 %s27, 2
      %s40 = sadd.s32 1, %s35
      %p41 = scmp.ge.s32.totalorder %s40, 1
      %s42 = scalar_select %p41, 0, %s40
      %s43 = sadd.s32 1, %s34
      %s44 = scalar_select %p41, %s43, %s34
      %p45 = scmp.ge.s32.totalorder %s44, 2
      %s46 = scalar_select %p45, 0, %s44
      %s47 = ssub.s32 %s34, %s46
      %s48 = ssub.s32 %s35, %s42
      %s49 = sor.u32 %s47, %s48
      %p50 = scmp.eq.s32.totalorder %s49, 0
      %s52 = sadd.s32 %s51, 1
      %s53 = scalar_select %p50, %s51, %s52
      %p56 = pneg %p50
      %p57 = scmp.eq.s32.totalorder %s27, 1
      %p58 = por %p56, %p57
      %p59 = scmp.ne.s32.totalorder %s51, %s54
      %p60 = scmp.eq.s32.totalorder %s27, 0
      %p61 = por %p59, %p60
      %p62 = scmp.ne.s32.totalorder %s51, %s54
      %p63 = scmp.eq.s32.totalorder %s32, 1
      %p64 = por %p62, %p63
      %p65 = scmp.ne.s32.totalorder %s54, %s55
      %p66 = scmp.eq.s32.totalorder %s32, 0
      %p67 = por %p65, %p66
      %p68 = scmp.ne.s32.totalorder %s54, %s55
      %p69 = scmp.eq.s32.totalorder %s33, 1
      %p70 = por %p68, %p69
      %p72 = scmp.ne.s32.totalorder %s55, %s71
      %p73 = scmp.eq.s32.totalorder %s33, 0
      %p74 = por %p72, %p73
      %s75 = ssub.s32 %s34, %s46
      %s76 = ssub.s32 %s35, %s42
      %s77 = sor.u32 %s75, %s76
      %p78 = scmp.eq.s32.totalorder %s77, 0
      %s80 = sadd.s32 %s79, 1
      %s81 = scalar_select %p78, %s79, %s80
      %p84 = pneg %p78
      %p85 = scmp.eq.s32.totalorder %s27, 1
      %p86 = por %p84, %p85
      %p87 = scmp.ne.s32.totalorder %s79, %s82
      %p88 = scmp.eq.s32.totalorder %s27, 0
      %p89 = por %p87, %p88
      %p90 = scmp.ne.s32.totalorder %s79, %s82
      %p91 = scmp.eq.s32.totalorder %s32, 1
      %p92 = por %p90, %p91
      %p93 = scmp.ne.s32.totalorder %s82, %s83
      %p94 = scmp.eq.s32.totalorder %s32, 0
      %p95 = por %p93, %p94
      %p96 = scmp.ne.s32.totalorder %s82, %s83
      %p97 = scmp.eq.s32.totalorder %s33, 1
      %p98 = por %p96, %p97
      %p100 = scmp.ne.s32.totalorder %s83, %s99
      %p101 = scmp.eq.s32.totalorder %s33, 0
      %p102 = por %p100, %p101
      %s103 = ssub.s32 %s34, %s46
      %s104 = ssub.s32 %s35, %s42
      %s105 = sor.u32 %s103, %s104
      %p106 = scmp.eq.s32.totalorder %s105, 0
      %s108 = sadd.s32 %s107, 1
      %s109 = scalar_select %p106, %s107, %s108
      %p112 = pneg %p106
      %p113 = scmp.eq.s32.totalorder %s27, 1
      %p114 = por %p112, %p113
      %p115 = scmp.ne.s32.totalorder %s107, %s110
      %p116 = scmp.eq.s32.totalorder %s27, 0
      %p117 = por %p115, %p116
      %p118 = scmp.ne.s32.totalorder %s107, %s110
      %p119 = scmp.eq.s32.totalorder %s32, 1
      %p120 = por %p118, %p119
      %p121 = scmp.ne.s32.totalorder %s110, %s111
      %p122 = scmp.eq.s32.totalorder %s32, 0
      %p123 = por %p121, %p122
      %p124 = scmp.ne.s32.totalorder %s110, %s111
      %p125 = scmp.eq.s32.totalorder %s33, 1
      %p126 = por %p124, %p125
      %p128 = scmp.ne.s32.totalorder %s111, %s127
      %p129 = scmp.eq.s32.totalorder %s33, 0
      %p130 = por %p128, %p129
      %s131 = ssub.s32 %s34, %s46
      %s132 = ssub.s32 %s35, %s42
      %s133 = sor.u32 %s131, %s132
      %p134 = scmp.eq.s32.totalorder %s133, 0
      %s136 = sadd.s32 %s135, 1
      %s137 = scalar_select %p134, %s135, %s136
      %p140 = pneg %p134
      %p141 = scmp.eq.s32.totalorder %s27, 1
      %p142 = por %p140, %p141
      %p143 = scmp.ne.s32.totalorder %s135, %s138
      %p144 = scmp.eq.s32.totalorder %s27, 0
      %p145 = por %p143, %p144
      %p146 = scmp.ne.s32.totalorder %s135, %s138
      %p147 = scmp.eq.s32.totalorder %s32, 1
      %p148 = por %p146, %p147
      %p149 = scmp.ne.s32.totalorder %s138, %s139
      %p150 = scmp.eq.s32.totalorder %s32, 0
      %p151 = por %p149, %p150
      %p152 = scmp.ne.s32.totalorder %s138, %s139
      %p153 = scmp.eq.s32.totalorder %s33, 1
      %p154 = por %p152, %p153
      %p156 = scmp.ne.s32.totalorder %s139, %s155
      %p157 = scmp.eq.s32.totalorder %s33, 0
      %p158 = por %p156, %p157
      %s159 = ssub.s32 %s34, %s46
      %s160 = ssub.s32 %s35, %s42
      %s161 = sor.u32 %s159, %s160
      %p162 = scmp.eq.s32.totalorder %s161, 0
      %s164 = sadd.s32 %s163, 1
      %s165 = scalar_select %p162, %s163, %s164
      %p168 = pneg %p162
      %p169 = scmp.eq.s32.totalorder %s27, 1
      %p170 = por %p168, %p169
      %p171 = scmp.ne.s32.totalorder %s163, %s166
      %p172 = scmp.eq.s32.totalorder %s27, 0
      %p173 = por %p171, %p172
      %p174 = scmp.ne.s32.totalorder %s163, %s166
      %p175 = scmp.eq.s32.totalorder %s32, 1
      %p176 = por %p174, %p175
      %p177 = scmp.ne.s32.totalorder %s166, %s167
      %p178 = scmp.eq.s32.totalorder %s32, 0
      %p179 = por %p177, %p178
      %p180 = scmp.ne.s32.totalorder %s166, %s167
      %p181 = scmp.eq.s32.totalorder %s33, 1
      %p182 = por %p180, %p181
      %p184 = scmp.ne.s32.totalorder %s167, %s183
      %p185 = scmp.eq.s32.totalorder %s33, 0
      %p186 = por %p184, %p185
      %s187 = ssub.s32 %s34, %s46
      %s188 = ssub.s32 %s35, %s42
      %s189 = sor.u32 %s187, %s188
      %p190 = scmp.eq.s32.totalorder %s189, 0
      %s192 = sadd.s32 %s191, 1
      %s193 = scalar_select %p190, %s191, %s192
      %p196 = pneg %p190
      %p197 = scmp.eq.s32.totalorder %s27, 1
      %p198 = por %p196, %p197
      %p199 = scmp.ne.s32.totalorder %s191, %s194
      %p200 = scmp.eq.s32.totalorder %s27, 0
      %p201 = por %p199, %p200
      %p202 = scmp.ne.s32.totalorder %s191, %s194
      %p203 = scmp.eq.s32.totalorder %s32, 1
      %p204 = por %p202, %p203
      %p205 = scmp.ne.s32.totalorder %s194, %s195
      %p206 = scmp.eq.s32.totalorder %s32, 0
      %p207 = por %p205, %p206
      %p208 = scmp.ne.s32.totalorder %s194, %s195
      %p209 = scmp.eq.s32.totalorder %s33, 1
      %p210 = por %p208, %p209
      %p212 = scmp.ne.s32.totalorder %s195, %s211
      %p213 = scmp.eq.s32.totalorder %s33, 0
      %p214 = por %p212, %p213
      %p215 = scmp.le.s32.totalorder 1, %s27
      %p216 = scmp.lt.s32.totalorder %s27, 3
      %p217 = pnand %p215, %p216
      %p218 = pneg %p217
      // Predicated region
      $region9: #{tpu_custom_call.1} parent=5 // pred_check
        _
      $region10: #{tpu_custom_call.1} parent=5 // pred_check_branch
        %220 = sbr.rel (%p217) target = $region12
      $region11: #{tpu_custom_call.1} parent=5 // pred_region
        %s221 = ssub.s32 %s27, 1
      $region12: #{tpu_custom_call.1} parent=5 // pred_fallthru
        _
      %p222 = scmp.lt.s32.totalorder %s27, 2
      // Predicated region
      $region13: #{tpu_custom_call.1} parent=5 // pred_check
        %p223 = pneg %p222
      $region14: #{tpu_custom_call.1} parent=5 // pred_check_branch
        %225 = sbr.rel (%p223) target = $region16
      $region15: #{tpu_custom_call.1} parent=5 // pred_region
        // Predicated region
        $region17: #{tpu_custom_call.1} parent=15 // pred_check
          %p226 = pneg %p61
        $region18: #{tpu_custom_call.1} parent=15 // pred_check_branch
          %228 = sbr.rel (%p226) target = $region20
        $region19: #{tpu_custom_call.1} parent=15 // pred_region
          %s229 = sand.u32 %s51, 1
          %s230 = scalar_lea.sflag [#allocation3], %s229
          %s231 = sand.u32 %s51, 1
          %s232 = smul.addr %s231, 8
          %s233 = scalar_lea.vmem [#allocation2], %s232
          %s235 = ssub.s32 128, 128
          %236 = vsyncadd %s230, %s235
          %s237 = sadd.s32 %s35, %s34
          %s238 = smul.addr %s237, 128
          %s239 = scalar_lea.hbm %s0, %s238
          %s241 = sshll.u32 %s233, 4
          %s242 = int_to_ptr.vmem [resolvable:$true] %s241
          %244 = dma.hbm_to_vmem [thread:$0]  %s239, 128, %s242, %s230
        $region20: #{tpu_custom_call.1} parent=15 // pred_fallthru
          _
        // Predicated region
        $region21: #{tpu_custom_call.1} parent=15 // pred_check
          %p245 = pneg %p89
        $region22: #{tpu_custom_call.1} parent=15 // pred_check_branch
          %247 = sbr.rel (%p245) target = $region24
        $region23: #{tpu_custom_call.1} parent=15 // pred_region
          %s248 = sand.u32 %s79, 1
          %s249 = scalar_lea.sflag [#allocation6], %s248
          %s250 = sand.u32 %s79, 1
          %s251 = smul.addr %s250, 8
          %s252 = scalar_lea.vmem [#allocation5], %s251
          %s254 = ssub.s32 128, 128
          %255 = vsyncadd %s249, %s254
          %s256 = sadd.s32 %s35, %s34
          %s257 = smul.addr %s256, 128
          %s258 = scalar_lea.hbm %s1, %s257
          %s260 = sshll.u32 %s252, 4
          %s261 = int_to_ptr.vmem [resolvable:$true] %s260
          %263 = dma.hbm_to_vmem [thread:$0]  %s258, 128, %s261, %s249
        $region24: #{tpu_custom_call.1} parent=15 // pred_fallthru
          _
      $region16: #{tpu_custom_call.1} parent=5 // pred_fallthru
        _
      %p264 = scmp.le.s32.totalorder 1, %s27
      %p265 = scmp.lt.s32.totalorder %s27, 3
      %p266 = pnand %p264, %p265
      %p267 = pneg %p266
      // Predicated region
      $region25: #{tpu_custom_call.1} parent=5 // pred_check
        _
      $region26: #{tpu_custom_call.1} parent=5 // pred_check_branch
        %269 = sbr.rel (%p266) target = $region28
      $region27: #{tpu_custom_call.1} parent=5 // pred_region
        %s270 = ssub.s32 %s27, 1
        %s271 = sand.u32 %s54, 1
        %s272 = scalar_lea.sflag [#allocation3], %s271
        %s273 = sand.u32 %s54, 1
        %s274 = smul.addr %s273, 8
        %s275 = scalar_lea.vmem [#allocation2], %s274
        // Predicated region
        $region29: #{tpu_custom_call.1} parent=27 // pred_check
          %p276 = pneg %p67
        $region30: #{tpu_custom_call.1} parent=27 // pred_check_branch
          %278 = sbr.rel (%p276) target = $region32
        $region31: #{tpu_custom_call.1} parent=27 // pred_region
          %279 = dma.done %s272, 128
        $region32: #{tpu_custom_call.1} parent=27 // pred_fallthru
          _
        %s280 = sand.u32 %s82, 1
        %s281 = scalar_lea.sflag [#allocation6], %s280
        %s282 = sand.u32 %s82, 1
        %s283 = smul.addr %s282, 8
        %s284 = scalar_lea.vmem [#allocation5], %s283
        // Predicated region
        $region33: #{tpu_custom_call.1} parent=27 // pred_check
          %p285 = pneg %p95
        $region34: #{tpu_custom_call.1} parent=27 // pred_check_branch
          %287 = sbr.rel (%p285) target = $region36
        $region35: #{tpu_custom_call.1} parent=27 // pred_region
          %288 = dma.done %s281, 128
        $region36: #{tpu_custom_call.1} parent=27 // pred_fallthru
          _
        %s289 = sand.u32 %s54, 1
        %s290 = scalar_lea.sflag [#allocation3], %s289
        %s291 = sand.u32 %s54, 1
        %s292 = smul.addr %s291, 8
        %s293 = scalar_lea.vmem [#allocation2], %s292
        %p294 = pneg %p67
        %p295 = pneg %p64
        %s296 = sand.u32 %s82, 1
        %s297 = scalar_lea.sflag [#allocation6], %s296
        %s298 = sand.u32 %s82, 1
        %s299 = smul.addr %s298, 8
        %s300 = scalar_lea.vmem [#allocation5], %s299
        %p301 = pneg %p95
        %p302 = pneg %p92
        %p303 = pneg %p123
        %p304 = pneg %p120
        %s305 = sand.u32 %s110, 1
        %s306 = scalar_lea.sflag [#allocation4], %s305
        %s307 = sand.u32 %s110, 1
        %s308 = smul.addr %s307, 8
        %s309 = scalar_lea.vmem [#allocation7], %s308
        %p310 = pneg %p151
        %p311 = pneg %p148
        %s312 = sand.u32 %s32, 1
        %s313 = scalar_lea.sflag [#allocation9], %s312
        %s314 = sand.u32 %s138, 1
        %s315 = smul.addr %s314, 8
        %s316 = scalar_lea.vmem [#allocation8], %s315
        %p317 = pneg %p179
        %p318 = pneg %p176
        %s319 = sand.u32 %s32, 1
        %s320 = scalar_lea.sflag [#allocation9], %s319
        %s321 = sand.u32 %s166, 1
        %s322 = smul.addr %s321, 8
        %s323 = scalar_lea.vmem [#allocation10], %s322
        %p324 = pneg %p207
        %p325 = pneg %p204
        %s326 = sand.u32 %s194, 1
        %s327 = scalar_lea.sflag [#allocation12], %s326
        %s328 = sand.u32 %s194, 1
        %s329 = smul.addr %s328, 8
        %s330 = scalar_lea.vmem [#allocation11], %s329
        %v331 = vld [vmem:[%s275] sm:$0xff]
        %v332 = vld [vmem:[%s284] sm:$0xff]
        %v333 = vand.u32 2147483647, %v331
        %v334 = vsub.f32 0.0, %v333
        %v335 = vmul.f32 %v334, 1.442695
        %v336 = vpow.pop %v335
        %v337 = vadd.f32 %v336, 1.0
        %v338 = vlog2.pop %v337
        %v339 = vmul.f32 %v338, 0.6931472
        %v340 = vrcp.pop %v337
        %v341 = vmul.f32 1.0, %v340
        %vm342 = vcmp.ge.f32.partialorder %v331, 0.0
        %v343 = vsub.f32 1.0, %v341
        %v344 = vsel %vm342, %v341, %v343
        %v345 = vmax.f32 %v331, 0.0
        %v346 = vmul.f32 %v331, %v332
        %v347 = vsub.f32 %v345, %v346
        %v348 = vadd.f32 %v347, %v339
        %v349 = vadd.f32 %v348, 0.0
        %350 = vst [vmem:[%s309] sm:$0xff] %v349
        %v351 = vmul.f32 %v344, %v332
        %v352 = vadd.f32 %v351, 0.0
        %353 = vst [vmem:[%s316] sm:$0xff] %v352
        %v354 = vadd.f32 %v344, 0.0
        %355 = vst [vmem:[%s323] sm:$0xff] %v354
        %v356 = vadd.f32 %v332, 0.0
        %357 = vst [vmem:[%s330] sm:$0xff] %v356
        %s358 = sand.u32 %s110, 1
        %s359 = scalar_lea.sflag [#allocation4], %s358
        %s360 = sand.u32 %s110, 1
        %s361 = smul.addr %s360, 8
        %s362 = scalar_lea.vmem [#allocation7], %s361
        %s363 = sand.u32 %s32, 1
        %s364 = scalar_lea.sflag [#allocation9], %s363
        %s365 = sand.u32 %s138, 1
        %s366 = smul.addr %s365, 8
        %s367 = scalar_lea.vmem [#allocation8], %s366
        %s368 = sand.u32 %s32, 1
        %s369 = scalar_lea.sflag [#allocation9], %s368
        %s370 = sand.u32 %s166, 1
        %s371 = smul.addr %s370, 8
        %s372 = scalar_lea.vmem [#allocation10], %s371
        %s373 = sand.u32 %s194, 1
        %s374 = scalar_lea.sflag [#allocation12], %s373
        %s375 = sand.u32 %s194, 1
        %s376 = smul.addr %s375, 8
        %s377 = scalar_lea.vmem [#allocation11], %s376
        // Predicated region
        $region37: #{tpu_custom_call.1} parent=27 // pred_check
          %p378 = pneg %p120
        $region38: #{tpu_custom_call.1} parent=27 // pred_check_branch
          %380 = sbr.rel (%p378) target = $region40
        $region39: #{tpu_custom_call.1} parent=27 // pred_region
          %s382 = ssub.s32 128, 128
          %383 = vsyncadd %s359, %s382
          %s384 = sadd.s32 %s37, %s36
          %s385 = smul.addr %s384, 128
          %s386 = scalar_lea.hbm %s2, %s385
          %s388 = sshll.u32 %s362, 4
          %s389 = int_to_ptr.vmem [resolvable:$true] %s388
          %391 = dma.vmem_to_hbm [thread:$0]  %s389, 128, %s386, %s359
        $region40: #{tpu_custom_call.1} parent=27 // pred_fallthru
          _
        // Predicated region
        $region41: #{tpu_custom_call.1} parent=27 // pred_check
          %p392 = pneg %p148
        $region42: #{tpu_custom_call.1} parent=27 // pred_check_branch
          %394 = sbr.rel (%p392) target = $region44
        $region43: #{tpu_custom_call.1} parent=27 // pred_region
          %s396 = ssub.s32 128, 128
          %397 = vsyncadd %s364, %s396
          %s398 = sadd.s32 %s37, %s36
          %s399 = smul.addr %s398, 128
          %s400 = scalar_lea.hbm %s3, %s399
          %s402 = sshll.u32 %s367, 4
          %s403 = int_to_ptr.vmem [resolvable:$true] %s402
          %405 = dma.vmem_to_hbm [thread:$0]  %s403, 128, %s400, %s364
        $region44: #{tpu_custom_call.1} parent=27 // pred_fallthru
          _
        // Predicated region
        $region45: #{tpu_custom_call.1} parent=27 // pred_check
          %p406 = pneg %p176
        $region46: #{tpu_custom_call.1} parent=27 // pred_check_branch
          %408 = sbr.rel (%p406) target = $region48
        $region47: #{tpu_custom_call.1} parent=27 // pred_region
          %s410 = ssub.s32 128, 128
          %411 = vsyncadd %s369, %s410
          %s412 = sadd.s32 %s37, %s36
          %s413 = smul.addr %s412, 128
          %s414 = scalar_lea.hbm %s4, %s413
          %s416 = sshll.u32 %s372, 4
          %s417 = int_to_ptr.vmem [resolvable:$true] %s416
          %419 = dma.vmem_to_hbm [thread:$0]  %s417, 128, %s414, %s369
        $region48: #{tpu_custom_call.1} parent=27 // pred_fallthru
          _
        // Predicated region
        $region49: #{tpu_custom_call.1} parent=27 // pred_check
          %p420 = pneg %p204
        $region50: #{tpu_custom_call.1} parent=27 // pred_check_branch
          %422 = sbr.rel (%p420) target = $region52
        $region51: #{tpu_custom_call.1} parent=27 // pred_region
          %s424 = ssub.s32 128, 128
          %425 = vsyncadd %s374, %s424
          %s426 = sadd.s32 %s37, %s36
          %s427 = smul.addr %s426, 128
          %s428 = scalar_lea.hbm %s5, %s427
          %s430 = sshll.u32 %s377, 4
          %s431 = int_to_ptr.vmem [resolvable:$true] %s430
          %433 = dma.vmem_to_hbm [thread:$0]  %s431, 128, %s428, %s374
        $region52: #{tpu_custom_call.1} parent=27 // pred_fallthru
          _
      $region28: #{tpu_custom_call.1} parent=5 // pred_fallthru
        _
      %p434 = scmp.le.s32.totalorder 2, %s27
      // Predicated region
      $region53: #{tpu_custom_call.1} parent=5 // pred_check
        %p435 = pneg %p434
      $region54: #{tpu_custom_call.1} parent=5 // pred_check_branch
        %437 = sbr.rel (%p435) target = $region56
      $region55: #{tpu_custom_call.1} parent=5 // pred_region
        %s438 = ssub.s32 %s27, 2
        // Predicated region
        $region57: #{tpu_custom_call.1} parent=55 // pred_check
          %p439 = pneg %p126
        $region58: #{tpu_custom_call.1} parent=55 // pred_check_branch
          %441 = sbr.rel (%p439) target = $region60
        $region59: #{tpu_custom_call.1} parent=55 // pred_region
          %s442 = sand.u32 %s111, 1
          %s443 = scalar_lea.sflag [#allocation4], %s442
          %s444 = sand.u32 %s111, 1
          %s445 = smul.addr %s444, 8
          %s446 = scalar_lea.vmem [#allocation7], %s445
          %447 = dma.done %s443, 128
        $region60: #{tpu_custom_call.1} parent=55 // pred_fallthru
          _
        // Predicated region
        $region61: #{tpu_custom_call.1} parent=55 // pred_check
          %p448 = pneg %p154
        $region62: #{tpu_custom_call.1} parent=55 // pred_check_branch
          %450 = sbr.rel (%p448) target = $region64
        $region63: #{tpu_custom_call.1} parent=55 // pred_region
          %s451 = sand.u32 %s33, 1
          %s452 = scalar_lea.sflag [#allocation9], %s451
          %s453 = sand.u32 %s139, 1
          %s454 = smul.addr %s453, 8
          %s455 = scalar_lea.vmem [#allocation8], %s454
          %456 = dma.done %s452, 128
        $region64: #{tpu_custom_call.1} parent=55 // pred_fallthru
          _
        // Predicated region
        $region65: #{tpu_custom_call.1} parent=55 // pred_check
          %p457 = pneg %p182
        $region66: #{tpu_custom_call.1} parent=55 // pred_check_branch
          %459 = sbr.rel (%p457) target = $region68
        $region67: #{tpu_custom_call.1} parent=55 // pred_region
          %s460 = sand.u32 %s33, 1
          %s461 = scalar_lea.sflag [#allocation9], %s460
          %s462 = sand.u32 %s167, 1
          %s463 = smul.addr %s462, 8
          %s464 = scalar_lea.vmem [#allocation10], %s463
          %465 = dma.done %s461, 128
        $region68: #{tpu_custom_call.1} parent=55 // pred_fallthru
          _
        // Predicated region
        $region69: #{tpu_custom_call.1} parent=55 // pred_check
          %p466 = pneg %p210
        $region70: #{tpu_custom_call.1} parent=55 // pred_check_branch
          %468 = sbr.rel (%p466) target = $region72
        $region71: #{tpu_custom_call.1} parent=55 // pred_region
          %s469 = sand.u32 %s195, 1
          %s470 = scalar_lea.sflag [#allocation12], %s469
          %s471 = sand.u32 %s195, 1
          %s472 = smul.addr %s471, 8
          %s473 = scalar_lea.vmem [#allocation11], %s472
          %474 = dma.done %s470, 128
        $region72: #{tpu_custom_call.1} parent=55 // pred_fallthru
          _
      $region56: #{tpu_custom_call.1} parent=5 // pred_fallthru
        _
    $region6: #{tpu_custom_call.1} parent=1 // loop_footer
      %s31 = sadd.s32 1, %s27
    $region7: #{tpu_custom_call.1} parent=1 // loop_footer_branch
      %26 = sbr.rel target = $region3
    $region8: #{tpu_custom_call.1} parent=1 // loop_exit
      _
    %475 = vsyncpa [#allocation3], 1
    %s476 = scalar_lea.sflag [#allocation3], 1
    %477 = vsyncpa %s476, 1
    %478 = vsyncpa [#allocation6], 1
    %s479 = scalar_lea.sflag [#allocation6], 1
    %480 = vsyncpa %s479, 1
    %481 = vsyncpa [#allocation4], 1
    %s482 = scalar_lea.sflag [#allocation4], 1
    %483 = vsyncpa %s482, 1
    %484 = vsyncpa [#allocation9], 1
    %s485 = scalar_lea.sflag [#allocation9], 1
    %486 = vsyncpa %s485, 1
    %487 = vsyncpa [#allocation12], 1
    %s488 = scalar_lea.sflag [#allocation12], 1
    %489 = vsyncpa %s488, 1

</llo_original>
